<compile_context>
chip_gen: v7x
topology: tpu7x:2x2x1
jax: 0.10.0
libtpu: 0.0.40
codegen_flags: <defaults>
</compile_context>

<pallas_src>
import functools

import numpy as np
import jax
import jax.numpy as jnp
from jax import lax
from jax.experimental import pallas as pl
from jax.experimental.pallas import tpu as pltpu


_K1D = {
    3: (0.274, 0.452, 0.274),
    5: (0.05, 0.25, 0.4, 0.25, 0.05),
    7: (0.0044, 0.054, 0.242, 0.3991, 0.242, 0.054, 0.0044),
    9: (0.0001, 0.0044, 0.054, 0.242, 0.3989, 0.242, 0.054, 0.0044, 0.0001),
}


def _gauss_kernel_2d(angRes):
    k = np.asarray(_K1D[angRes], dtype=np.float32).reshape(1, -1)
    return (k.T @ k).astype(np.float32)  # == torch.matmul(k.t(), k)


# ---------------------------------------------------------------------------
# pltpu.roll probe: detect shift convention (and that roll lowers for our
# 3-D f32 / small-dim usage).  +1: matches jnp.roll; -1: opposite; 0: fall
# back to the concatenate-based replicate padding.
# ---------------------------------------------------------------------------
_ROLL_MODE_CACHE = None


def _probe_roll_mode():
    global _ROLL_MODE_CACHE
    if _ROLL_MODE_CACHE is not None:
        return _ROLL_MODE_CACHE
    mode = 0
    try:
        shape = (2, 16, 16)
        x_np = np.arange(np.prod(shape), dtype=np.float32).reshape(shape)

        def _probe_kernel(x_ref, o1_ref, o2_ref):
            v = x_ref[...]
            o1_ref[...] = pltpu.roll(v, 1, axis=1)
            o2_ref[...] = pltpu.roll(v, 1, axis=2)

        o1, o2 = pl.pallas_call(
            _probe_kernel,
            out_shape=(jax.ShapeDtypeStruct(shape, jnp.float32),
                       jax.ShapeDtypeStruct(shape, jnp.float32)),
        )(jnp.asarray(x_np))
        o1 = np.asarray(jax.block_until_ready(o1))
        o2 = np.asarray(jax.block_until_ready(o2))
        if (np.array_equal(o1, np.roll(x_np, 1, axis=1))
                and np.array_equal(o2, np.roll(x_np, 1, axis=2))):
            mode = 1
        elif (np.array_equal(o1, np.roll(x_np, -1, axis=1))
              and np.array_equal(o2, np.roll(x_np, -1, axis=2))):
            mode = -1
    except Exception:
        mode = 0
    _ROLL_MODE_CACHE = mode
    return mode


# ---------------------------------------------------------------------------
# Separable 1-D replicate-padded convolutions (traced inside the kernel).
# ---------------------------------------------------------------------------
def _conv1d_roll(img, axis, taps, pos_idx, roll_mode):
    """1D conv along `axis` (1=sublanes, 2=lanes) with replicate padding built
    from pltpu.roll (XLU) + per-tap edge fixups; operands stay size-dense."""
    size = img.shape[axis]
    r = len(taps) // 2
    if axis == 2:
        first, last = img[:, :, :1], img[:, :, size - 1:size]
    else:
        first, last = img[:, :1, :], img[:, size - 1:size, :]
    out = None
    for t, w in enumerate(taps):
        s = t - r  # this tap reads img[pos + s] (index clamped to [0, size-1])
        if s == 0:
            tap = img
        else:
            shift = ((-s) if roll_mode > 0 else s) % size
            rolled = pltpu.roll(img, shift, axis=axis)
            if s < 0:
                tap = jnp.where(pos_idx < (-s), first, rolled)      # left/top edge
            else:
                tap = jnp.where(pos_idx >= (size - s), last, rolled)  # right/bottom
        term = w * tap
        out = term if out is None else out + term
    return out


def _conv1d_concat(img, axis, taps):
    """Fallback: replicate padding via concatenation (proven-correct path)."""
    Nc, H, W = img.shape
    r = len(taps) // 2
    size = img.shape[axis]
    if axis == 2:
        left = jnp.broadcast_to(img[:, :, :1], (Nc, H, r))
        right = jnp.broadcast_to(img[:, :, size - 1:size], (Nc, H, r))
        p = jnp.concatenate([left, img, right], axis=2)
        out = taps[0] * p[:, :, 0:size]
        for t in range(1, len(taps)):
            out = out + taps[t] * p[:, :, t:t + size]
    else:
        top = jnp.broadcast_to(img[:, :1, :], (Nc, r, W))
        bot = jnp.broadcast_to(img[:, size - 1:size, :], (Nc, r, W))
        p = jnp.concatenate([top, img, bot], axis=1)
        out = taps[0] * p[:, 0:size, :]
        for t in range(1, len(taps)):
            out = out + taps[t] * p[:, t:t + size, :]
    return out


# ---------------------------------------------------------------------------
# Kernel: one grid step = one batch chunk's partial L1 sum (no cross-step state).
# ---------------------------------------------------------------------------
def _gradient_loss_kernel(x_ref, y_ref, o_ref, *, k1d, roll_mode):
    # laplacian(x) - laplacian(y) == laplacian(x - y): single laplacian on d.
    d = x_ref[...].astype(jnp.float32) - y_ref[...].astype(jnp.float32)
    Nc, H, W = d.shape

    # Small (1, H, W) index planes, hoisted once and shared.
    row_idx = lax.broadcasted_iota(jnp.int32, (1, H, W), 1)
    col_idx = lax.broadcasted_iota(jnp.int32, (1, H, W), 2)
    even_mask = ((row_idx & 1) == 0) & ((col_idx & 1) == 0)

    def conv_gauss(img, tap_scale):
        # Separable Gaussian (outer(k1d, k1d)): row pass along lanes (with the
        # scale folded into the taps), then column pass along sublanes.
        taps_w = tuple(v * tap_scale for v in k1d)
        if roll_mode != 0:
            img = _conv1d_roll(img, 2, taps_w, col_idx, roll_mode)
            img = _conv1d_roll(img, 1, k1d, row_idx, roll_mode)
        else:
            img = _conv1d_concat(img, 2, taps_w)
            img = _conv1d_concat(img, 1, k1d)
        return img

    g = conv_gauss(d, 1.0)
    # new_filter[..., ::2, ::2] = filtered[..., ::2, ::2] * 4 (rest zero); the
    # *4 is folded into the second conv's taps, the mask is one select.
    nf = jnp.where(even_mask, g, 0.0)
    lap = d - conv_gauss(nf, 4.0)
    partial = jnp.sum(jnp.abs(lap))

    # Per-block partial sum in a lane-aligned (1, 8, 128) tile, scalar at
    # [0, 0, 0] and zeros elsewhere (exact; parallel-grid safe).
    rr = lax.broadcasted_iota(jnp.int32, (1, 8, 128), 1)
    cc = lax.broadcasted_iota(jnp.int32, (1, 8, 128), 2)
    o_ref[...] = jnp.where((rr == 0) & (cc == 0), partial, jnp.float32(0.0))


def _pick_chunk(N, H, W, budget_bytes=4 << 20):
    """Images per grid step: largest count whose per-input f32 block fits the
    budget.  No divisibility requirement (batch axis is zero-padded)."""
    per_img = max(H * W * 4, 1)
    return int(max(1, min(N, budget_bytes // per_img)))


def gradient_loss_cal(x, y, angRes, n_chunk=None):
    """x, y: NCHW (B, 1, H, W) arrays, matching the PyTorch module. Returns scalar loss."""
    assert x.shape == y.shape
    B, C, H, W = x.shape
    assert C == 1, "PyTorch module's conv weight is (1,1,k,k) with groups=1 -> C must be 1"
    k1d = tuple(float(v) for v in _K1D[angRes])

    N = B * C
    xf = jnp.asarray(x, jnp.float32).reshape(N, H, W)
    yf = jnp.asarray(y, jnp.float32).reshape(N, H, W)

    if n_chunk is None:
        n_chunk = _pick_chunk(N, H, W)
    n_chunk = int(min(max(1, n_chunk), N))
    num_blocks = pl.cdiv(N, n_chunk)
    n_pad = num_blocks * n_chunk - N
    if n_pad:
        # Zero padding is exact: d = x - y = 0 there => laplacian contributes 0.
        xf = jnp.pad(xf, ((0, n_pad), (0, 0), (0, 0)))
        yf = jnp.pad(yf, ((0, n_pad), (0, 0), (0, 0)))

    roll_mode = _probe_roll_mode()
    kernel = functools.partial(_gradient_loss_kernel, k1d=k1d, roll_mode=roll_mode)

    partials = pl.pallas_call(
        kernel,
        out_shape=jax.ShapeDtypeStruct((num_blocks, 8, 128), jnp.float32),
        grid=(num_blocks,),
        in_specs=[
            pl.BlockSpec((n_chunk, H, W), lambda n: (n, 0, 0)),
            pl.BlockSpec((n_chunk, H, W), lambda n: (n, 0, 0)),
        ],
        out_specs=pl.BlockSpec((1, 8, 128), lambda n: (n, 0, 0)),
        compiler_params=pltpu.CompilerParams(
            # Per-block partial outputs, no cross-step state -> parallel grid
            # (lets Mosaic shard the batch axis across v7x's two TensorCores).
            dimension_semantics=("parallel",),
            vmem_limit_bytes=48 * 1024 * 1024,
        ),
    )(xf, yf)

    # nn.L1Loss(reduction='mean'): normalize by the ORIGINAL element count.
    return jnp.sum(partials) * jnp.float32(1.0 / (N * H * W))


# ---------------------------------------------------------------------------
# Pure-JAX reference mirroring the PyTorch forward (for correctness check).
# ---------------------------------------------------------------------------
def _reference(x, y, angRes):
    kern2d = jnp.asarray(_gauss_kernel_2d(angRes))
    r = angRes // 2

    def conv_gauss(img):
        p = jnp.pad(img, ((0, 0), (0, 0), (r, r), (r, r)), mode="edge")
        w = kern2d[None, None]  # (1,1,k,k)
        return jax.lax.conv_general_dilated(
            p, w, (1, 1), "VALID", dimension_numbers=("NCHW", "OIHW", "NCHW")
        )

    def lap(cur):
        f = conv_gauss(cur)
        _, _, H, W = f.shape
        ii = jnp.arange(H)[:, None]
        jj = jnp.arange(W)[None, :]
        m = ((ii % 2) == 0) & ((jj % 2) == 0)
        nf = jnp.where(m[None, None], f * 4.0, 0.0)
        return cur - conv_gauss(nf)

    return jnp.mean(jnp.abs(lap(x) - lap(y)))


if __name__ == "__main__":
    key = jax.random.PRNGKey(0)
    kx, ky = jax.random.split(key)
    B, C, H, W = 4, 1, 16, 16
    angRes = 5

    x = jax.random.normal(kx, (B, C, H, W), dtype=jnp.float32)
    y = jax.random.normal(ky, (B, C, H, W), dtype=jnp.float32)

    ref = jax.block_until_ready(_reference(x, y, angRes))

    # Auto-picked chunk (single block for these small shapes).
    loss_auto = jax.block_until_ready(gradient_loss_cal(x, y, angRes))
    # Multi-block parallel grid (4 independent partial-sum blocks).
    loss_multi = jax.block_until_ready(gradient_loss_cal(x, y, angRes, n_chunk=1))
    # Non-divisor chunk: exercises the zero-padded last block path.
    loss_pad = jax.block_until_ready(gradient_loss_cal(x, y, angRes, n_chunk=3))

    for v in (loss_auto, loss_multi, loss_pad):
        np.testing.assert_allclose(np.asarray(v), np.asarray(ref), rtol=1e-5, atol=1e-5)

    print("KERNEL_OK")
</pallas_src>

<mosaic_0001>
module attributes {stable_mosaic.version = 11 : i64} {
  func.func @_probe_kernel(%arg0: memref<2x16x16xf32, #tpu.memory_space<vmem>>, %arg1: memref<2x16x16xf32, #tpu.memory_space<vmem>>, %arg2: memref<2x16x16xf32, #tpu.memory_space<vmem>>) attributes {dimension_semantics = [], scalar_prefetch = 0 : i64, scratch_operands = 0 : i64, tpu.core_type = #tpu.core_type<tc>} {
    %c0 = arith.constant 0 : index
    %c0_0 = arith.constant 0 : index
    %c0_1 = arith.constant 0 : index
    %0 = vector.load %arg0[%c0, %c0_0, %c0_1] : memref<2x16x16xf32, #tpu.memory_space<vmem>>, vector<2x16x16xf32>
    %c1_i32 = arith.constant 1 : i32
    %1 = tpu.dynamic_rotate %0 by %c1_i32 dim 1 : vector<2x16x16xf32>, i32 -> vector<2x16x16xf32>
    %c0_2 = arith.constant 0 : index
    %c0_3 = arith.constant 0 : index
    %c0_4 = arith.constant 0 : index
    %2 = vector.load %arg1[%c0_2, %c0_3, %c0_4] : memref<2x16x16xf32, #tpu.memory_space<vmem>>, vector<2x16x16xf32>
    tpu.vector_store %arg1[%c0_2, %c0_3, %c0_4], %1 {strides = array<i32>} : memref<2x16x16xf32, #tpu.memory_space<vmem>>, vector<2x16x16xf32>,
    %c1_i32_5 = arith.constant 1 : i32
    %3 = tpu.dynamic_rotate %0 by %c1_i32_5 dim 2 : vector<2x16x16xf32>, i32 -> vector<2x16x16xf32>
    %c0_6 = arith.constant 0 : index
    %c0_7 = arith.constant 0 : index
    %c0_8 = arith.constant 0 : index
    %4 = vector.load %arg2[%c0_6, %c0_7, %c0_8] : memref<2x16x16xf32, #tpu.memory_space<vmem>>, vector<2x16x16xf32>
    tpu.vector_store %arg2[%c0_6, %c0_7, %c0_8], %3 {strides = array<i32>} : memref<2x16x16xf32, #tpu.memory_space<vmem>>, vector<2x16x16xf32>,
    return
  }
}

module attributes {stable_mosaic.version = 11 : i64} {
  func.func @_gradient_loss_kernel(%arg0: i32, %arg1: memref<4x16x16xf32, #tpu.memory_space<vmem>>, %arg2: memref<4x16x16xf32, #tpu.memory_space<vmem>>, %arg3: memref<1x8x128xf32, #tpu.memory_space<vmem>>) attributes {dimension_semantics = [#tpu.dimension_semantics<parallel>], iteration_bounds = array<i64: 1>, scalar_prefetch = 0 : i64, scratch_operands = 0 : i64, tpu.core_type = #tpu.core_type<tc>, window_params = [{transform_indices = @transform_0, window_bounds = array<i64: 4, 16, 16>}, {transform_indices = @transform_1, window_bounds = array<i64: 4, 16, 16>}, {transform_indices = @transform_2, window_bounds = array<i64: 1, 8, 128>}]} {
    %c0 = arith.constant 0 : index
    %c0_0 = arith.constant 0 : index
    %c0_1 = arith.constant 0 : index
    %0 = vector.load %arg1[%c0, %c0_0, %c0_1] : memref<4x16x16xf32, #tpu.memory_space<vmem>>, vector<4x16x16xf32>
    %c0_2 = arith.constant 0 : index
    %c0_3 = arith.constant 0 : index
    %c0_4 = arith.constant 0 : index
    %1 = vector.load %arg2[%c0_2, %c0_3, %c0_4] : memref<4x16x16xf32, #tpu.memory_space<vmem>>, vector<4x16x16xf32>
    %2 = arith.subf %0, %1 : vector<4x16x16xf32>
    %3 = tpu.iota {dimensions = array<i32: 1>} : vector<1x16x16xi32>
    %4 = tpu.iota {dimensions = array<i32: 2>} : vector<1x16x16xi32>
    %c1_i32 = arith.constant 1 : i32
    %5 = vector.broadcast %c1_i32 : i32 to vector<1x16x16xi32>
    %6 = arith.andi %3, %5 : vector<1x16x16xi32>
    %c0_i32 = arith.constant 0 : i32
    %7 = vector.broadcast %c0_i32 : i32 to vector<1x16x16xi32>
    %8 = arith.cmpi eq, %6, %7 : vector<1x16x16xi32>
    %c1_i32_5 = arith.constant 1 : i32
    %9 = vector.broadcast %c1_i32_5 : i32 to vector<1x16x16xi32>
    %10 = arith.andi %4, %9 : vector<1x16x16xi32>
    %c0_i32_6 = arith.constant 0 : i32
    %11 = vector.broadcast %c0_i32_6 : i32 to vector<1x16x16xi32>
    %12 = arith.cmpi eq, %10, %11 : vector<1x16x16xi32>
    %13 = arith.andi %8, %12 : vector<1x16x16xi1>
    %14 = vector.extract_strided_slice %2 {offsets = [0, 0, 0], sizes = [4, 16, 1], strides = [1, 1, 1]} : vector<4x16x16xf32> to vector<4x16x1xf32>
    %15 = vector.shape_cast %14 : vector<4x16x1xf32> to vector<4x16x1xf32>
    %16 = vector.broadcast %15 : vector<4x16x1xf32> to vector<4x16x2xf32>
    %17 = vector.extract_strided_slice %2 {offsets = [0, 0, 15], sizes = [4, 16, 1], strides = [1, 1, 1]} : vector<4x16x16xf32> to vector<4x16x1xf32>
    %18 = vector.shape_cast %17 : vector<4x16x1xf32> to vector<4x16x1xf32>
    %19 = vector.broadcast %18 : vector<4x16x1xf32> to vector<4x16x2xf32>
    %20 = tpu.concatenate %16, %2, %19 in 2 : vector<4x16x2xf32>, vector<4x16x16xf32>, vector<4x16x2xf32> -> vector<4x16x20xf32>
    %21 = vector.extract_strided_slice %20 {offsets = [0, 0, 0], sizes = [4, 16, 16], strides = [1, 1, 1]} : vector<4x16x20xf32> to vector<4x16x16xf32>
    %cst = arith.constant 5.000000e-02 : f32
    %22 = vector.broadcast %cst : f32 to vector<4x16x16xf32>
    %23 = arith.mulf %22, %21 : vector<4x16x16xf32>
    %24 = vector.extract_strided_slice %20 {offsets = [0, 0, 1], sizes = [4, 16, 16], strides = [1, 1, 1]} : vector<4x16x20xf32> to vector<4x16x16xf32>
    %cst_7 = arith.constant 2.500000e-01 : f32
    %25 = vector.broadcast %cst_7 : f32 to vector<4x16x16xf32>
    %26 = arith.mulf %25, %24 : vector<4x16x16xf32>
    %27 = arith.addf %23, %26 : vector<4x16x16xf32>
    %28 = vector.extract_strided_slice %20 {offsets = [0, 0, 2], sizes = [4, 16, 16], strides = [1, 1, 1]} : vector<4x16x20xf32> to vector<4x16x16xf32>
    %cst_8 = arith.constant 4.000000e-01 : f32
    %29 = vector.broadcast %cst_8 : f32 to vector<4x16x16xf32>
    %30 = arith.mulf %29, %28 : vector<4x16x16xf32>
    %31 = arith.addf %27, %30 : vector<4x16x16xf32>
    %32 = vector.extract_strided_slice %20 {offsets = [0, 0, 3], sizes = [4, 16, 16], strides = [1, 1, 1]} : vector<4x16x20xf32> to vector<4x16x16xf32>
    %cst_9 = arith.constant 2.500000e-01 : f32
    %33 = vector.broadcast %cst_9 : f32 to vector<4x16x16xf32>
    %34 = arith.mulf %33, %32 : vector<4x16x16xf32>
    %35 = arith.addf %31, %34 : vector<4x16x16xf32>
    %36 = vector.extract_strided_slice %20 {offsets = [0, 0, 4], sizes = [4, 16, 16], strides = [1, 1, 1]} : vector<4x16x20xf32> to vector<4x16x16xf32>
    %cst_10 = arith.constant 5.000000e-02 : f32
    %37 = vector.broadcast %cst_10 : f32 to vector<4x16x16xf32>
    %38 = arith.mulf %37, %36 : vector<4x16x16xf32>
    %39 = arith.addf %35, %38 : vector<4x16x16xf32>
    %40 = vector.extract_strided_slice %39 {offsets = [0, 0, 0], sizes = [4, 1, 16], strides = [1, 1, 1]} : vector<4x16x16xf32> to vector<4x1x16xf32>
    %41 = vector.shape_cast %40 : vector<4x1x16xf32> to vector<4x1x16xf32>
    %42 = vector.broadcast %41 : vector<4x1x16xf32> to vector<4x2x16xf32>
    %43 = vector.extract_strided_slice %39 {offsets = [0, 15, 0], sizes = [4, 1, 16], strides = [1, 1, 1]} : vector<4x16x16xf32> to vector<4x1x16xf32>
    %44 = vector.shape_cast %43 : vector<4x1x16xf32> to vector<4x1x16xf32>
    %45 = vector.broadcast %44 : vector<4x1x16xf32> to vector<4x2x16xf32>
    %46 = tpu.concatenate %42, %39, %45 in 1 : vector<4x2x16xf32>, vector<4x16x16xf32>, vector<4x2x16xf32> -> vector<4x20x16xf32>
    %47 = vector.extract_strided_slice %46 {offsets = [0, 0, 0], sizes = [4, 16, 16], strides = [1, 1, 1]} : vector<4x20x16xf32> to vector<4x16x16xf32>
    %cst_11 = arith.constant 5.000000e-02 : f32
    %48 = vector.broadcast %cst_11 : f32 to vector<4x16x16xf32>
    %49 = arith.mulf %48, %47 : vector<4x16x16xf32>
    %50 = vector.extract_strided_slice %46 {offsets = [0, 1, 0], sizes = [4, 16, 16], strides = [1, 1, 1]} : vector<4x20x16xf32> to vector<4x16x16xf32>
    %cst_12 = arith.constant 2.500000e-01 : f32
    %51 = vector.broadcast %cst_12 : f32 to vector<4x16x16xf32>
    %52 = arith.mulf %51, %50 : vector<4x16x16xf32>
    %53 = arith.addf %49, %52 : vector<4x16x16xf32>
    %54 = vector.extract_strided_slice %46 {offsets = [0, 2, 0], sizes = [4, 16, 16], strides = [1, 1, 1]} : vector<4x20x16xf32> to vector<4x16x16xf32>
    %cst_13 = arith.constant 4.000000e-01 : f32
    %55 = vector.broadcast %cst_13 : f32 to vector<4x16x16xf32>
    %56 = arith.mulf %55, %54 : vector<4x16x16xf32>
    %57 = arith.addf %53, %56 : vector<4x16x16xf32>
    %58 = vector.extract_strided_slice %46 {offsets = [0, 3, 0], sizes = [4, 16, 16], strides = [1, 1, 1]} : vector<4x20x16xf32> to vector<4x16x16xf32>
    %cst_14 = arith.constant 2.500000e-01 : f32
    %59 = vector.broadcast %cst_14 : f32 to vector<4x16x16xf32>
    %60 = arith.mulf %59, %58 : vector<4x16x16xf32>
    %61 = arith.addf %57, %60 : vector<4x16x16xf32>
    %62 = vector.extract_strided_slice %46 {offsets = [0, 4, 0], sizes = [4, 16, 16], strides = [1, 1, 1]} : vector<4x20x16xf32> to vector<4x16x16xf32>
    %cst_15 = arith.constant 5.000000e-02 : f32
    %63 = vector.broadcast %cst_15 : f32 to vector<4x16x16xf32>
    %64 = arith.mulf %63, %62 : vector<4x16x16xf32>
    %65 = arith.addf %61, %64 : vector<4x16x16xf32>
    %cst_16 = arith.constant 0.000000e+00 : f32
    %66 = vector.shape_cast %13 : vector<1x16x16xi1> to vector<1x16x16xi1>
    %67 = vector.broadcast %66 : vector<1x16x16xi1> to vector<4x16x16xi1>
    %68 = vector.broadcast %cst_16 : f32 to vector<4x16x16xf32>
    %69 = arith.select %67, %65, %68 : vector<4x16x16xi1>, vector<4x16x16xf32>
    %70 = vector.extract_strided_slice %69 {offsets = [0, 0, 0], sizes = [4, 16, 1], strides = [1, 1, 1]} : vector<4x16x16xf32> to vector<4x16x1xf32>
    %71 = vector.shape_cast %70 : vector<4x16x1xf32> to vector<4x16x1xf32>
    %72 = vector.broadcast %71 : vector<4x16x1xf32> to vector<4x16x2xf32>
    %73 = vector.extract_strided_slice %69 {offsets = [0, 0, 15], sizes = [4, 16, 1], strides = [1, 1, 1]} : vector<4x16x16xf32> to vector<4x16x1xf32>
    %74 = vector.shape_cast %73 : vector<4x16x1xf32> to vector<4x16x1xf32>
    %75 = vector.broadcast %74 : vector<4x16x1xf32> to vector<4x16x2xf32>
    %76 = tpu.concatenate %72, %69, %75 in 2 : vector<4x16x2xf32>, vector<4x16x16xf32>, vector<4x16x2xf32> -> vector<4x16x20xf32>
    %77 = vector.extract_strided_slice %76 {offsets = [0, 0, 0], sizes = [4, 16, 16], strides = [1, 1, 1]} : vector<4x16x20xf32> to vector<4x16x16xf32>
    %cst_17 = arith.constant 2.000000e-01 : f32
    %78 = vector.broadcast %cst_17 : f32 to vector<4x16x16xf32>
    %79 = arith.mulf %78, %77 : vector<4x16x16xf32>
    %80 = vector.extract_strided_slice %76 {offsets = [0, 0, 1], sizes = [4, 16, 16], strides = [1, 1, 1]} : vector<4x16x20xf32> to vector<4x16x16xf32>
    %cst_18 = arith.constant 1.000000e+00 : f32
    %81 = vector.broadcast %cst_18 : f32 to vector<4x16x16xf32>
    %82 = arith.mulf %81, %80 : vector<4x16x16xf32>
    %83 = arith.addf %79, %82 : vector<4x16x16xf32>
    %84 = vector.extract_strided_slice %76 {offsets = [0, 0, 2], sizes = [4, 16, 16], strides = [1, 1, 1]} : vector<4x16x20xf32> to vector<4x16x16xf32>
    %cst_19 = arith.constant 1.600000e+00 : f32
    %85 = vector.broadcast %cst_19 : f32 to vector<4x16x16xf32>
    %86 = arith.mulf %85, %84 : vector<4x16x16xf32>
    %87 = arith.addf %83, %86 : vector<4x16x16xf32>
    %88 = vector.extract_strided_slice %76 {offsets = [0, 0, 3], sizes = [4, 16, 16], strides = [1, 1, 1]} : vector<4x16x20xf32> to vector<4x16x16xf32>
    %cst_20 = arith.constant 1.000000e+00 : f32
    %89 = vector.broadcast %cst_20 : f32 to vector<4x16x16xf32>
    %90 = arith.mulf %89, %88 : vector<4x16x16xf32>
    %91 = arith.addf %87, %90 : vector<4x16x16xf32>
    %92 = vector.extract_strided_slice %76 {offsets = [0, 0, 4], sizes = [4, 16, 16], strides = [1, 1, 1]} : vector<4x16x20xf32> to vector<4x16x16xf32>
    %cst_21 = arith.constant 2.000000e-01 : f32
    %93 = vector.broadcast %cst_21 : f32 to vector<4x16x16xf32>
    %94 = arith.mulf %93, %92 : vector<4x16x16xf32>
    %95 = arith.addf %91, %94 : vector<4x16x16xf32>
    %96 = vector.extract_strided_slice %95 {offsets = [0, 0, 0], sizes = [4, 1, 16], strides = [1, 1, 1]} : vector<4x16x16xf32> to vector<4x1x16xf32>
    %97 = vector.shape_cast %96 : vector<4x1x16xf32> to vector<4x1x16xf32>
    %98 = vector.broadcast %97 : vector<4x1x16xf32> to vector<4x2x16xf32>
    %99 = vector.extract_strided_slice %95 {offsets = [0, 15, 0], sizes = [4, 1, 16], strides = [1, 1, 1]} : vector<4x16x16xf32> to vector<4x1x16xf32>
    %100 = vector.shape_cast %99 : vector<4x1x16xf32> to vector<4x1x16xf32>
    %101 = vector.broadcast %100 : vector<4x1x16xf32> to vector<4x2x16xf32>
    %102 = tpu.concatenate %98, %95, %101 in 1 : vector<4x2x16xf32>, vector<4x16x16xf32>, vector<4x2x16xf32> -> vector<4x20x16xf32>
    %103 = vector.extract_strided_slice %102 {offsets = [0, 0, 0], sizes = [4, 16, 16], strides = [1, 1, 1]} : vector<4x20x16xf32> to vector<4x16x16xf32>
    %cst_22 = arith.constant 5.000000e-02 : f32
    %104 = vector.broadcast %cst_22 : f32 to vector<4x16x16xf32>
    %105 = arith.mulf %104, %103 : vector<4x16x16xf32>
    %106 = vector.extract_strided_slice %102 {offsets = [0, 1, 0], sizes = [4, 16, 16], strides = [1, 1, 1]} : vector<4x20x16xf32> to vector<4x16x16xf32>
    %cst_23 = arith.constant 2.500000e-01 : f32
    %107 = vector.broadcast %cst_23 : f32 to vector<4x16x16xf32>
    %108 = arith.mulf %107, %106 : vector<4x16x16xf32>
    %109 = arith.addf %105, %108 : vector<4x16x16xf32>
    %110 = vector.extract_strided_slice %102 {offsets = [0, 2, 0], sizes = [4, 16, 16], strides = [1, 1, 1]} : vector<4x20x16xf32> to vector<4x16x16xf32>
    %cst_24 = arith.constant 4.000000e-01 : f32
    %111 = vector.broadcast %cst_24 : f32 to vector<4x16x16xf32>
    %112 = arith.mulf %111, %110 : vector<4x16x16xf32>
    %113 = arith.addf %109, %112 : vector<4x16x16xf32>
    %114 = vector.extract_strided_slice %102 {offsets = [0, 3, 0], sizes = [4, 16, 16], strides = [1, 1, 1]} : vector<4x20x16xf32> to vector<4x16x16xf32>
    %cst_25 = arith.constant 2.500000e-01 : f32
    %115 = vector.broadcast %cst_25 : f32 to vector<4x16x16xf32>
    %116 = arith.mulf %115, %114 : vector<4x16x16xf32>
    %117 = arith.addf %113, %116 : vector<4x16x16xf32>
    %118 = vector.extract_strided_slice %102 {offsets = [0, 4, 0], sizes = [4, 16, 16], strides = [1, 1, 1]} : vector<4x20x16xf32> to vector<4x16x16xf32>
    %cst_26 = arith.constant 5.000000e-02 : f32
    %119 = vector.broadcast %cst_26 : f32 to vector<4x16x16xf32>
    %120 = arith.mulf %119, %118 : vector<4x16x16xf32>
    %121 = arith.addf %117, %120 : vector<4x16x16xf32>
    %122 = arith.subf %2, %121 : vector<4x16x16xf32>
    %123 = math.absf %122 : vector<4x16x16xf32>
    %124 = vector.shape_cast %123 : vector<4x16x16xf32> to vector<1x4x16x16xf32>
    %cst_27 = arith.constant dense<0.000000e+00> : vector<1xf32>
    %125 = vector.multi_reduction <add>, %124, %cst_27 [1, 2, 3] : vector<1x4x16x16xf32> to vector<1xf32>
    %126 = vector.shape_cast %125 : vector<1xf32> to vector<1x1x1x1xf32>
    %127 = vector.extract %126[0, 0, 0, 0] : f32 from vector<1x1x1x1xf32>
    %128 = tpu.iota {dimensions = array<i32: 1>} : vector<1x8x128xi32>
    %129 = tpu.iota {dimensions = array<i32: 2>} : vector<1x8x128xi32>
    %c0_i32_28 = arith.constant 0 : i32
    %130 = vector.broadcast %c0_i32_28 : i32 to vector<1x8x128xi32>
    %131 = arith.cmpi eq, %128, %130 : vector<1x8x128xi32>
    %c0_i32_29 = arith.constant 0 : i32
    %132 = vector.broadcast %c0_i32_29 : i32 to vector<1x8x128xi32>
    %133 = arith.cmpi eq, %129, %132 : vector<1x8x128xi32>
    %134 = arith.andi %131, %133 : vector<1x8x128xi1>
    %cst_30 = arith.constant 0.000000e+00 : f32
    %135 = vector.broadcast %127 : f32 to vector<1x8x128xf32>
    %136 = vector.broadcast %cst_30 : f32 to vector<1x8x128xf32>
    %137 = arith.select %134, %135, %136 : vector<1x8x128xi1>, vector<1x8x128xf32>
    %c0_31 = arith.constant 0 : index
    %c0_32 = arith.constant 0 : index
    %c0_33 = arith.constant 0 : index
    %138 = vector.load %arg3[%c0_31, %c0_32, %c0_33] : memref<1x8x128xf32, #tpu.memory_space<vmem>>, vector<1x8x128xf32>
    tpu.vector_store %arg3[%c0_31, %c0_32, %c0_33], %137 {strides = array<i32>} : memref<1x8x128xf32, #tpu.memory_space<vmem>>, vector<1x8x128xf32>,
    return
  }
  func.func @transform_0(%arg0: i32) -> (i32, i32, i32) {
    %c0_i32 = arith.constant 0 : i32
    %c0_i32_0 = arith.constant 0 : i32
    %c0_i32_1 = arith.constant 0 : i32
    return %arg0, %c0_i32, %c0_i32_0 : i32, i32, i32
  }
  func.func @transform_1(%arg0: i32) -> (i32, i32, i32) {
    %c0_i32 = arith.constant 0 : i32
    %c0_i32_0 = arith.constant 0 : i32
    %c0_i32_1 = arith.constant 0 : i32
    return %arg0, %c0_i32, %c0_i32_0 : i32, i32, i32
  }
  func.func @transform_2(%arg0: i32) -> (i32, i32, i32) {
    %c0_i32 = arith.constant 0 : i32
    %c0_i32_0 = arith.constant 0 : i32
    %c0_i32_1 = arith.constant 0 : i32
    return %arg0, %c0_i32, %c0_i32_0 : i32, i32, i32
  }
}

</mosaic_0001>

<llo_original>
// kernel: tpu_custom_call.1
$region0: #{tpu_custom_call.1}
  #allocation0 [shape = 'u32[]', space=smem, size = 0x4, offset = 0x4, fixed_abs, tag = 'smem constant byte address 0x4 - core index']
  #allocation1 [shape = 'u32[144,128]{1,0:T(1,128)}', space=vmem, size = 0x12000, scoped, tag = 'internal scratch']
  %s0 = inlined_call_operand.hbm [shape: f32[2,16,16], index: 0, kind: input, shape index: {}]
  %s1 = inlined_call_operand.hbm [shape: f32[2,16,16], index: 1, kind: output, shape index: {0}]
  %s2 = inlined_call_operand.hbm [shape: f32[2,16,16], index: 2, kind: output, shape index: {1}]
  %3 = xla_tuple %s1, %s2
  %s4 = sld [smem:[#allocation0]]
  $region26: #{tpu_custom_call.1} parent=0
    _
  %s6 = ssub.s32 1, %s4
  %s7 = scalar_select 0, %s6, %s4
  $region1: #{tpu_custom_call.1} parent=0
    #allocation2 [shape = 'u8[16384]{0}', space=vmem, size = 0x4000, scoped, tag = 'input window, operand 0, single buffered']
    #allocation3 [shape = 's32[1]{0}', space=sflag, size = 0x4, scoped, tag = 'scoped memory for tpu_custom_call.1']
    #allocation4 [shape = 's32[1]{0}', space=sflag, size = 0x4, scoped, tag = 'scoped memory for tpu_custom_call.1']
    #allocation5 [shape = 'u8[16384]{0}', space=vmem, size = 0x4000, scoped, tag = 'output window, operand 0, single buffered']
    #allocation6 [shape = 'u8[16384]{0}', space=vmem, size = 0x4000, scoped, tag = 'output window, operand 1, single buffered']
    #allocation7 [shape = 's32[1]{0}', space=sflag, size = 0x4, scoped, tag = 'scoped memory for tpu_custom_call.1']
    %8 = vsyncpa [#allocation3], 0
    %9 = vsyncpa [#allocation4], 0
    %10 = vsyncpa [#allocation7], 0
    // Predicated region
    $region2: #{tpu_custom_call.1} parent=1 // pred_check
      _
    $region3: #{tpu_custom_call.1} parent=1 // pred_check_branch
      %12 = sbr.rel (0) target = $region5
    $region4: #{tpu_custom_call.1} parent=1 // pred_region
      %s14 = ssub.s32 512, 512
      %15 = vsyncadd [#allocation3], %s14
      %s16 = sshll.u32 [#allocation2], 4
      %s17 = int_to_ptr.vmem [resolvable:$true] %s16
      %22 = dma.hbm_to_vmem [thread:$0]  %s0, 512, %s17, [#allocation3], 128, 128, 8
    $region5: #{tpu_custom_call.1} parent=1 // pred_fallthru
      _
    // Predicated region
    $region6: #{tpu_custom_call.1} parent=1 // pred_check
      _
    $region7: #{tpu_custom_call.1} parent=1 // pred_check_branch
      %24 = sbr.rel (0) target = $region9
    $region8: #{tpu_custom_call.1} parent=1 // pred_region
      %25 = dma.done [#allocation3], 512
    $region9: #{tpu_custom_call.1} parent=1 // pred_fallthru
      _
    %v26 = vld [vmem:[#allocation2] sm:$0xff]
    %v27 = vld [vmem:[#allocation2 + $0x8] sm:$0xff]
    %v28 = vld [vmem:[#allocation2 + $0x10] sm:$0xff]
    %v29 = vld [vmem:[#allocation2 + $0x18] sm:$0xff]
    %v30 = vrot.slane %v26, 7
    %v31 = vrot.slane %v28, 7
    %v32 = vrot.slane %v27, 7
    %v33 = vrot.slane %v29, 7
    %v34 = vlaneseq
    %v35 = vshrl.u32 %v34, 7
    %vm36 = vcmp.lt.s32.totalorder %v35, 1
    %v37 = vsel %vm36, %v30, %v32
    %v38 = vsel %vm36, %v31, %v33
    %v39 = vsel %vm36, %v32, %v30
    %v40 = vsel %vm36, %v33, %v31
    %vm41 = vcmask 130048
    %42 = vst.msk [vmem:[#allocation5] sm:$0xff] %vm41, %v39
    %43 = vst.msk [vmem:[#allocation5 + $0x8] sm:$0xff] %vm41, %v37
    %44 = vst.msk [vmem:[#allocation5 + $0x10] sm:$0xff] %vm41, %v40
    %45 = vst.msk [vmem:[#allocation5 + $0x18] sm:$0xff] %vm41, %v38
    %vm46 = vcmask 1047680
    %47 = vrot.lane.b32.xlu0 %v26, 16
    %v48 = vpop.permute.xlu0 %47
    %v49 = vsel %vm46, %v48, %v26
    %50 = vrot.lane.b32.xlu0 %v27, 16
    %v51 = vpop.permute.xlu0 %50
    %v52 = vsel %vm46, %v51, %v27
    %53 = vrot.lane.b32.xlu0 %v28, 16
    %v54 = vpop.permute.xlu0 %53
    %v55 = vsel %vm46, %v54, %v28
    %56 = vrot.lane.b32.xlu0 %v29, 16
    %v57 = vpop.permute.xlu0 %56
    %v58 = vsel %vm46, %v57, %v29
    %59 = vrot.lane.b32.xlu0 %v49, 16
    %v60 = vpop.permute.xlu0 %59
    %61 = vrot.lane.b32.xlu0 %v52, 16
    %v62 = vpop.permute.xlu0 %61
    %63 = vrot.lane.b32.xlu0 %v55, 16
    %v64 = vpop.permute.xlu0 %63
    %65 = vrot.lane.b32.xlu0 %v58, 16
    %v66 = vpop.permute.xlu0 %65
    %v67 = vsel %vm46, %v60, %v26
    %v68 = vsel %vm46, %v62, %v27
    %v69 = vsel %vm46, %v64, %v28
    %v70 = vsel %vm46, %v66, %v29
    %75 = vrot.lane.b32.xlu0 %v67, 113
    %v76 = vpop.permute.xlu0 %75
    %77 = vrot.lane.b32.xlu0 %v68, 113
    %v78 = vpop.permute.xlu0 %77
    %79 = vrot.lane.b32.xlu0 %v69, 113
    %v80 = vpop.permute.xlu0 %79
    %81 = vrot.lane.b32.xlu0 %v70, 113
    %v82 = vpop.permute.xlu0 %81
    %87 = vst.msk [vmem:[#allocation6] sm:$0xff] %vm41, %v76
    %88 = vst.msk [vmem:[#allocation6 + $0x8] sm:$0xff] %vm41, %v78
    %89 = vst.msk [vmem:[#allocation6 + $0x10] sm:$0xff] %vm41, %v80
    %90 = vst.msk [vmem:[#allocation6 + $0x18] sm:$0xff] %vm41, %v82
    // Predicated region
    $region10: #{tpu_custom_call.1} parent=1 // pred_check
      _
    $region11: #{tpu_custom_call.1} parent=1 // pred_check_branch
      %92 = sbr.rel (0) target = $region13
    $region12: #{tpu_custom_call.1} parent=1 // pred_region
      %s94 = ssub.s32 512, 512
      %95 = vsyncadd [#allocation4], %s94
      %s96 = sshll.u32 [#allocation5], 4
      %s97 = int_to_ptr.vmem [resolvable:$true] %s96
      %102 = dma.vmem_to_hbm [thread:$0]  %s97, 512, %s1, [#allocation4], 128, 128, 8
    $region13: #{tpu_custom_call.1} parent=1 // pred_fallthru
      _
    // Predicated region
    $region14: #{tpu_custom_call.1} parent=1 // pred_check
      _
    $region15: #{tpu_custom_call.1} parent=1 // pred_check_branch
      %104 = sbr.rel (0) target = $region17
    $region16: #{tpu_custom_call.1} parent=1 // pred_region
      %s106 = ssub.s32 512, 512
      %107 = vsyncadd [#allocation7], %s106
      %s108 = sshll.u32 [#allocation6], 4
      %s109 = int_to_ptr.vmem [resolvable:$true] %s108
      %114 = dma.vmem_to_hbm [thread:$0]  %s109, 512, %s2, [#allocation7], 128, 128, 8
    $region17: #{tpu_custom_call.1} parent=1 // pred_fallthru
      _
    // Predicated region
    $region18: #{tpu_custom_call.1} parent=1 // pred_check
      _
    $region19: #{tpu_custom_call.1} parent=1 // pred_check_branch
      %116 = sbr.rel (0) target = $region21
    $region20: #{tpu_custom_call.1} parent=1 // pred_region
      %117 = dma.done [#allocation4], 512
    $region21: #{tpu_custom_call.1} parent=1 // pred_fallthru
      _
    // Predicated region
    $region22: #{tpu_custom_call.1} parent=1 // pred_check
      _
    $region23: #{tpu_custom_call.1} parent=1 // pred_check_branch
      %119 = sbr.rel (0) target = $region25
    $region24: #{tpu_custom_call.1} parent=1 // pred_region
      %120 = dma.done [#allocation7], 512
    $region25: #{tpu_custom_call.1} parent=1 // pred_fallthru
      _
    %121 = vsyncpa [#allocation3], 1
    %122 = vsyncpa [#allocation4], 1
    %123 = vsyncpa [#allocation7], 1

// kernel: tpu_custom_call.1
$region0: #{tpu_custom_call.1}
  #allocation0 [shape = 'u32[]', space=smem, size = 0x4, offset = 0x4, fixed_abs, tag = 'smem constant byte address 0x4 - core index']
  #allocation1 [shape = 'u32[144,128]{1,0:T(1,128)}', space=vmem, size = 0x12000, scoped, tag = 'internal scratch']
  %s0 = inlined_call_operand.hbm [shape: f32[4,16,16], index: 0, kind: input, shape index: {}]
  %s1 = inlined_call_operand.hbm [shape: f32[4,16,16], index: 1, kind: input, shape index: {}]
  %s2 = inlined_call_operand.hbm [shape: f32[1,8,128], index: 2, kind: output, shape index: {}]
  %s3 = sld [smem:[#allocation0]]
  $region26: #{tpu_custom_call.1} parent=0
    _
  %s5 = ssub.s32 1, %s3
  %s6 = scalar_select 0, %s5, %s3
  $region1: #{tpu_custom_call.1} parent=0
    #allocation2 [shape = 'u8[32768]{0}', space=vmem, size = 0x8000, scoped, tag = 'input window, operand 0, single buffered']
    #allocation3 [shape = 's32[1]{0}', space=sflag, size = 0x4, scoped, tag = 'scoped memory for tpu_custom_call.1']
    #allocation4 [shape = 's32[1]{0}', space=sflag, size = 0x4, scoped, tag = 'scoped memory for tpu_custom_call.1']
    #allocation5 [shape = 'u8[32768]{0}', space=vmem, size = 0x8000, scoped, tag = 'input window, operand 1, single buffered']
    #allocation6 [shape = 's32[1]{0}', space=sflag, size = 0x4, scoped, tag = 'scoped memory for tpu_custom_call.1']
    #allocation7 [shape = 'u8[4096]{0}', space=vmem, size = 0x1000, scoped, tag = 'output window, operand 0, single buffered']
    %7 = vsyncpa [#allocation3], 0
    %8 = vsyncpa [#allocation6], 0
    %9 = vsyncpa [#allocation4], 0
    // Predicated region
    $region2: #{tpu_custom_call.1} parent=1 // pred_check
      _
    $region3: #{tpu_custom_call.1} parent=1 // pred_check_branch
      %11 = sbr.rel (0) target = $region5
    $region4: #{tpu_custom_call.1} parent=1 // pred_region
      %s13 = ssub.s32 1024, 1024
      %14 = vsyncadd [#allocation3], %s13
      %s15 = sshll.u32 [#allocation2], 4
      %s16 = int_to_ptr.vmem [resolvable:$true] %s15
      %21 = dma.hbm_to_vmem [thread:$0]  %s0, 1024, %s16, [#allocation3], 128, 128, 8
    $region5: #{tpu_custom_call.1} parent=1 // pred_fallthru
      _
    // Predicated region
    $region6: #{tpu_custom_call.1} parent=1 // pred_check
      _
    $region7: #{tpu_custom_call.1} parent=1 // pred_check_branch
      %23 = sbr.rel (0) target = $region9
    $region8: #{tpu_custom_call.1} parent=1 // pred_region
      %s25 = ssub.s32 1024, 1024
      %26 = vsyncadd [#allocation6], %s25
      %s27 = sshll.u32 [#allocation5], 4
      %s28 = int_to_ptr.vmem [resolvable:$true] %s27
      %33 = dma.hbm_to_vmem [thread:$0]  %s1, 1024, %s28, [#allocation6], 128, 128, 8
    $region9: #{tpu_custom_call.1} parent=1 // pred_fallthru
      _
    // Predicated region
    $region10: #{tpu_custom_call.1} parent=1 // pred_check
      _
    $region11: #{tpu_custom_call.1} parent=1 // pred_check_branch
      %35 = sbr.rel (0) target = $region13
    $region12: #{tpu_custom_call.1} parent=1 // pred_region
      %36 = dma.done [#allocation3], 1024
    $region13: #{tpu_custom_call.1} parent=1 // pred_fallthru
      _
    // Predicated region
    $region14: #{tpu_custom_call.1} parent=1 // pred_check
      _
    $region15: #{tpu_custom_call.1} parent=1 // pred_check_branch
      %38 = sbr.rel (0) target = $region17
    $region16: #{tpu_custom_call.1} parent=1 // pred_region
      %39 = dma.done [#allocation6], 1024
    $region17: #{tpu_custom_call.1} parent=1 // pred_fallthru
      _
    %v40 = vld [vmem:[#allocation2] sm:$0xff]
    %v41 = vld [vmem:[#allocation2 + $0x8] sm:$0xff]
    %v42 = vld [vmem:[#allocation2 + $0x10] sm:$0xff]
    %v43 = vld [vmem:[#allocation2 + $0x18] sm:$0xff]
    %v44 = vld [vmem:[#allocation2 + $0x20] sm:$0xff]
    %v45 = vld [vmem:[#allocation2 + $0x28] sm:$0xff]
    %v46 = vld [vmem:[#allocation2 + $0x30] sm:$0xff]
    %v47 = vld [vmem:[#allocation2 + $0x38] sm:$0xff]
    %v48 = vld [vmem:[#allocation5] sm:$0xff]
    %v49 = vld [vmem:[#allocation5 + $0x8] sm:$0xff]
    %v50 = vld [vmem:[#allocation5 + $0x10] sm:$0xff]
    %v51 = vld [vmem:[#allocation5 + $0x18] sm:$0xff]
    %v52 = vld [vmem:[#allocation5 + $0x20] sm:$0xff]
    %v53 = vld [vmem:[#allocation5 + $0x28] sm:$0xff]
    %v54 = vld [vmem:[#allocation5 + $0x30] sm:$0xff]
    %v55 = vld [vmem:[#allocation5 + $0x38] sm:$0xff]
    %v56 = vsub.f32 %v40, %v48
    %v57 = vsub.f32 %v41, %v49
    %v58 = vsub.f32 %v42, %v50
    %v59 = vsub.f32 %v43, %v51
    %v60 = vsub.f32 %v44, %v52
    %v61 = vsub.f32 %v45, %v53
    %v62 = vsub.f32 %v46, %v54
    %v63 = vsub.f32 %v47, %v55
    %v64 = vlaneseq
    %v65 = vshrl.u32 %v64, 7
    %v66 = vadd.s32 %v65, 8
    %v67 = vlaneseq
    %v68 = vand.u32 %v67, 127
    %v69 = vand.u32 %v65, 1
    %v70 = vand.u32 %v66, 1
    %vm71 = vcmp.eq.s32.totalorder %v69, 0
    %vm72 = vcmp.eq.s32.totalorder %v70, 0
    %v73 = vand.u32 %v68, 1
    %vm74 = vcmp.eq.s32.totalorder %v73, 0
    %vm75 = vmand %vm71, %vm74
    %vm76 = vmand %vm72, %vm74
    %78 = vset.pattern.permute.xlu0 0
    %79 = vperm.xlu0 %78, %v56
    %v80 = vpop.permute.xlu0 %79
    %83 = vset.pattern.permute.xlu0 0
    %84 = vperm.xlu0 %83, %v57
    %v85 = vpop.permute.xlu0 %84
    %88 = vset.pattern.permute.xlu0 0
    %89 = vperm.xlu0 %88, %v58
    %v90 = vpop.permute.xlu0 %89
    %93 = vset.pattern.permute.xlu0 0
    %94 = vperm.xlu0 %93, %v59
    %v95 = vpop.permute.xlu0 %94
    %98 = vset.pattern.permute.xlu0 0
    %99 = vperm.xlu0 %98, %v60
    %v100 = vpop.permute.xlu0 %99
    %103 = vset.pattern.permute.xlu0 0
    %104 = vperm.xlu0 %103, %v61
    %v105 = vpop.permute.xlu0 %104
    %108 = vset.pattern.permute.xlu0 0
    %109 = vperm.xlu0 %108, %v62
    %v110 = vpop.permute.xlu0 %109
    %113 = vset.pattern.permute.xlu0 0
    %114 = vperm.xlu0 %113, %v63
    %v115 = vpop.permute.xlu0 %114
    %117 = vset.pattern.permute.xlu0 15
    %118 = vperm.xlu0 %117, %v56
    %v119 = vpop.permute.xlu0 %118
    %121 = vset.pattern.permute.xlu0 15
    %122 = vperm.xlu0 %121, %v57
    %v123 = vpop.permute.xlu0 %122
    %125 = vset.pattern.permute.xlu0 15
    %126 = vperm.xlu0 %125, %v58
    %v127 = vpop.permute.xlu0 %126
    %129 = vset.pattern.permute.xlu0 15
    %130 = vperm.xlu0 %129, %v59
    %v131 = vpop.permute.xlu0 %130
    %133 = vset.pattern.permute.xlu0 15
    %134 = vperm.xlu0 %133, %v60
    %v135 = vpop.permute.xlu0 %134
    %137 = vset.pattern.permute.xlu0 15
    %138 = vperm.xlu0 %137, %v61
    %v139 = vpop.permute.xlu0 %138
    %141 = vset.pattern.permute.xlu0 15
    %142 = vperm.xlu0 %141, %v62
    %v143 = vpop.permute.xlu0 %142
    %145 = vset.pattern.permute.xlu0 15
    %146 = vperm.xlu0 %145, %v63
    %v147 = vpop.permute.xlu0 %146
    %149 = vrot.lane.b32.xlu0 %v56, 2
    %v150 = vpop.permute.xlu0 %149
    %151 = vrot.lane.b32.xlu0 %v57, 2
    %v152 = vpop.permute.xlu0 %151
    %153 = vrot.lane.b32.xlu0 %v58, 2
    %v154 = vpop.permute.xlu0 %153
    %155 = vrot.lane.b32.xlu0 %v59, 2
    %v156 = vpop.permute.xlu0 %155
    %157 = vrot.lane.b32.xlu0 %v60, 2
    %v158 = vpop.permute.xlu0 %157
    %159 = vrot.lane.b32.xlu0 %v61, 2
    %v160 = vpop.permute.xlu0 %159
    %161 = vrot.lane.b32.xlu0 %v62, 2
    %v162 = vpop.permute.xlu0 %161
    %163 = vrot.lane.b32.xlu0 %v63, 2
    %v164 = vpop.permute.xlu0 %163
    %vm173 = vcmask 15360
    %v174 = vsel %vm173, %v80, %v150
    %v175 = vsel %vm173, %v85, %v152
    %v176 = vsel %vm173, %v90, %v154
    %v177 = vsel %vm173, %v95, %v156
    %v178 = vsel %vm173, %v100, %v158
    %v179 = vsel %vm173, %v105, %v160
    %v180 = vsel %vm173, %v110, %v162
    %v181 = vsel %vm173, %v115, %v164
    %vm182 = vcmask 146432
    %v183 = vsel %vm182, %v174, %v119
    %v184 = vsel %vm182, %v175, %v123
    %v185 = vsel %vm182, %v176, %v127
    %v186 = vsel %vm182, %v177, %v131
    %v187 = vsel %vm182, %v178, %v135
    %v188 = vsel %vm182, %v179, %v139
    %v189 = vsel %vm182, %v180, %v143
    %v190 = vsel %vm182, %v181, %v147
    %v191 = vmul.f32 %v183, 0.05
    %v192 = vmul.f32 %v184, 0.05
    %v193 = vmul.f32 %v185, 0.05
    %v194 = vmul.f32 %v186, 0.05
    %v195 = vmul.f32 %v187, 0.05
    %v196 = vmul.f32 %v188, 0.05
    %v197 = vmul.f32 %v189, 0.05
    %v198 = vmul.f32 %v190, 0.05
    %v199 = vmul.f32 %v183, 0.25
    %v200 = vmul.f32 %v184, 0.25
    %v201 = vmul.f32 %v185, 0.25
    %v202 = vmul.f32 %v186, 0.25
    %v203 = vmul.f32 %v187, 0.25
    %v204 = vmul.f32 %v188, 0.25
    %v205 = vmul.f32 %v189, 0.25
    %v206 = vmul.f32 %v190, 0.25
    %215 = vrot.lane.b32.xlu0 %v199, 127
    %v216 = vpop.permute.xlu0 %215
    %217 = vrot.lane.b32.xlu0 %v200, 127
    %v218 = vpop.permute.xlu0 %217
    %219 = vrot.lane.b32.xlu0 %v201, 127
    %v220 = vpop.permute.xlu0 %219
    %221 = vrot.lane.b32.xlu0 %v202, 127
    %v222 = vpop.permute.xlu0 %221
    %223 = vrot.lane.b32.xlu0 %v203, 127
    %v224 = vpop.permute.xlu0 %223
    %225 = vrot.lane.b32.xlu0 %v204, 127
    %v226 = vpop.permute.xlu0 %225
    %227 = vrot.lane.b32.xlu0 %v205, 127
    %v228 = vpop.permute.xlu0 %227
    %229 = vrot.lane.b32.xlu0 %v206, 127
    %v230 = vpop.permute.xlu0 %229
    %v239 = vadd.f32 %v191, %v216
    %v240 = vadd.f32 %v192, %v218
    %v241 = vadd.f32 %v193, %v220
    %v242 = vadd.f32 %v194, %v222
    %v243 = vadd.f32 %v195, %v224
    %v244 = vadd.f32 %v196, %v226
    %v245 = vadd.f32 %v197, %v228
    %v246 = vadd.f32 %v198, %v230
    %v247 = vmul.f32 %v183, 0.4
    %v248 = vmul.f32 %v184, 0.4
    %v249 = vmul.f32 %v185, 0.4
    %v250 = vmul.f32 %v186, 0.4
    %v251 = vmul.f32 %v187, 0.4
    %v252 = vmul.f32 %v188, 0.4
    %v253 = vmul.f32 %v189, 0.4
    %v254 = vmul.f32 %v190, 0.4
    %263 = vrot.lane.b32.xlu0 %v247, 126
    %v264 = vpop.permute.xlu0 %263
    %265 = vrot.lane.b32.xlu0 %v248, 126
    %v266 = vpop.permute.xlu0 %265
    %267 = vrot.lane.b32.xlu0 %v249, 126
    %v268 = vpop.permute.xlu0 %267
    %269 = vrot.lane.b32.xlu0 %v250, 126
    %v270 = vpop.permute.xlu0 %269
    %271 = vrot.lane.b32.xlu0 %v251, 126
    %v272 = vpop.permute.xlu0 %271
    %273 = vrot.lane.b32.xlu0 %v252, 126
    %v274 = vpop.permute.xlu0 %273
    %275 = vrot.lane.b32.xlu0 %v253, 126
    %v276 = vpop.permute.xlu0 %275
    %277 = vrot.lane.b32.xlu0 %v254, 126
    %v278 = vpop.permute.xlu0 %277
    %v287 = vadd.f32 %v239, %v264
    %v288 = vadd.f32 %v240, %v266
    %v289 = vadd.f32 %v241, %v268
    %v290 = vadd.f32 %v242, %v270
    %v291 = vadd.f32 %v243, %v272
    %v292 = vadd.f32 %v244, %v274
    %v293 = vadd.f32 %v245, %v276
    %v294 = vadd.f32 %v246, %v278
    %295 = vrot.lane.b32.xlu0 %v199, 125
    %v296 = vpop.permute.xlu0 %295
    %297 = vrot.lane.b32.xlu0 %v200, 125
    %v298 = vpop.permute.xlu0 %297
    %299 = vrot.lane.b32.xlu0 %v201, 125
    %v300 = vpop.permute.xlu0 %299
    %301 = vrot.lane.b32.xlu0 %v202, 125
    %v302 = vpop.permute.xlu0 %301
    %303 = vrot.lane.b32.xlu0 %v203, 125
    %v304 = vpop.permute.xlu0 %303
    %305 = vrot.lane.b32.xlu0 %v204, 125
    %v306 = vpop.permute.xlu0 %305
    %307 = vrot.lane.b32.xlu0 %v205, 125
    %v308 = vpop.permute.xlu0 %307
    %309 = vrot.lane.b32.xlu0 %v206, 125
    %v310 = vpop.permute.xlu0 %309
    %v319 = vadd.f32 %v287, %v296
    %v320 = vadd.f32 %v288, %v298
    %v321 = vadd.f32 %v289, %v300
    %v322 = vadd.f32 %v290, %v302
    %v323 = vadd.f32 %v291, %v304
    %v324 = vadd.f32 %v292, %v306
    %v325 = vadd.f32 %v293, %v308
    %v326 = vadd.f32 %v294, %v310
    %335 = vrot.lane.b32.xlu0 %v191, 124
    %v336 = vpop.permute.xlu0 %335
    %337 = vrot.lane.b32.xlu0 %v192, 124
    %v338 = vpop.permute.xlu0 %337
    %339 = vrot.lane.b32.xlu0 %v193, 124
    %v340 = vpop.permute.xlu0 %339
    %341 = vrot.lane.b32.xlu0 %v194, 124
    %v342 = vpop.permute.xlu0 %341
    %343 = vrot.lane.b32.xlu0 %v195, 124
    %v344 = vpop.permute.xlu0 %343
    %345 = vrot.lane.b32.xlu0 %v196, 124
    %v346 = vpop.permute.xlu0 %345
    %347 = vrot.lane.b32.xlu0 %v197, 124
    %v348 = vpop.permute.xlu0 %347
    %349 = vrot.lane.b32.xlu0 %v198, 124
    %v350 = vpop.permute.xlu0 %349
    %v359 = vadd.f32 %v319, %v336
    %v360 = vadd.f32 %v320, %v338
    %v361 = vadd.f32 %v321, %v340
    %v362 = vadd.f32 %v322, %v342
    %v363 = vadd.f32 %v323, %v344
    %v364 = vadd.f32 %v324, %v346
    %v365 = vadd.f32 %v325, %v348
    %v366 = vadd.f32 %v326, %v350
    %v367 = vlaneseq
    %v368 = vshrl.u32 %v367, 7
    %v369 = vsub.s32 0, %v368
    %v370 = vrot.slane %v359, %v369
    %v371 = vlaneseq
    %v372 = vshrl.u32 %v371, 7
    %v373 = vsub.s32 0, %v372
    %v374 = vrot.slane %v361, %v373
    %v375 = vlaneseq
    %v376 = vshrl.u32 %v375, 7
    %v377 = vsub.s32 0, %v376
    %v378 = vrot.slane %v363, %v377
    %v379 = vlaneseq
    %v380 = vshrl.u32 %v379, 7
    %v381 = vsub.s32 0, %v380
    %v382 = vrot.slane %v365, %v381
    %v383 = vlaneseq
    %v384 = vshrl.u32 %v383, 7
    %v385 = vsub.s32 7, %v384
    %v386 = vrot.slane %v360, %v385
    %v387 = vlaneseq
    %v388 = vshrl.u32 %v387, 7
    %v389 = vsub.s32 7, %v388
    %v390 = vrot.slane %v362, %v389
    %v391 = vlaneseq
    %v392 = vshrl.u32 %v391, 7
    %v393 = vsub.s32 7, %v392
    %v394 = vrot.slane %v364, %v393
    %v395 = vlaneseq
    %v396 = vshrl.u32 %v395, 7
    %v397 = vsub.s32 7, %v396
    %v398 = vrot.slane %v366, %v397
    %vm407 = vcmask 1041408
    %v408 = vrot.slane %v359, 6
    %v409 = vrot.slane %v360, 6
    %v410 = vsel %vm407, %v408, %v409
    %v411 = vrot.slane %v361, 6
    %v412 = vrot.slane %v362, 6
    %v413 = vsel %vm407, %v411, %v412
    %v414 = vrot.slane %v363, 6
    %v415 = vrot.slane %v364, 6
    %v416 = vsel %vm407, %v414, %v415
    %v417 = vrot.slane %v365, 6
    %v418 = vrot.slane %v366, 6
    %v419 = vsel %vm407, %v417, %v418
    %v432 = vsel %vm407, %v370, %v408
    %v433 = vsel %vm407, %v374, %v411
    %v434 = vsel %vm407, %v378, %v414
    %v435 = vsel %vm407, %v382, %v417
    %v436 = vsel %vm407, %v409, %v386
    %v437 = vsel %vm407, %v412, %v390
    %v438 = vsel %vm407, %v415, %v394
    %v439 = vsel %vm407, %v418, %v398
    %v440 = vmul.f32 %v432, 0.05
    %v441 = vmul.f32 %v410, 0.05
    %v442 = vmul.f32 %v433, 0.05
    %v443 = vmul.f32 %v413, 0.05
    %v444 = vmul.f32 %v434, 0.05
    %v445 = vmul.f32 %v416, 0.05
    %v446 = vmul.f32 %v435, 0.05
    %v447 = vmul.f32 %v419, 0.05
    %v448 = vmul.f32 %v432, 0.25
    %v449 = vmul.f32 %v410, 0.25
    %v450 = vmul.f32 %v436, 0.25
    %v451 = vmul.f32 %v433, 0.25
    %v452 = vmul.f32 %v413, 0.25
    %v453 = vmul.f32 %v437, 0.25
    %v454 = vmul.f32 %v434, 0.25
    %v455 = vmul.f32 %v416, 0.25
    %v456 = vmul.f32 %v438, 0.25
    %v457 = vmul.f32 %v435, 0.25
    %v458 = vmul.f32 %v419, 0.25
    %v459 = vmul.f32 %v439, 0.25
    %vm472 = vcmask 1046528
    %v473 = vrot.slane %v448, 1
    %v474 = vrot.slane %v449, 1
    %v475 = vsel %vm472, %v473, %v474
    %v476 = vrot.slane %v450, 1
    %v477 = vsel %vm472, %v474, %v476
    %v478 = vrot.slane %v451, 1
    %v479 = vrot.slane %v452, 1
    %v480 = vsel %vm472, %v478, %v479
    %v481 = vrot.slane %v453, 1
    %v482 = vsel %vm472, %v479, %v481
    %v483 = vrot.slane %v454, 1
    %v484 = vrot.slane %v455, 1
    %v485 = vsel %vm472, %v483, %v484
    %v486 = vrot.slane %v456, 1
    %v487 = vsel %vm472, %v484, %v486
    %v488 = vrot.slane %v457, 1
    %v489 = vrot.slane %v458, 1
    %v490 = vsel %vm472, %v488, %v489
    %v491 = vrot.slane %v459, 1
    %v492 = vsel %vm472, %v489, %v491
    %v501 = vadd.f32 %v440, %v475
    %v502 = vadd.f32 %v441, %v477
    %v503 = vadd.f32 %v442, %v480
    %v504 = vadd.f32 %v443, %v482
    %v505 = vadd.f32 %v444, %v485
    %v506 = vadd.f32 %v445, %v487
    %v507 = vadd.f32 %v446, %v490
    %v508 = vadd.f32 %v447, %v492
    %v509 = vmul.f32 %v432, 0.4
    %v510 = vmul.f32 %v410, 0.4
    %v511 = vmul.f32 %v436, 0.4
    %v512 = vmul.f32 %v433, 0.4
    %v513 = vmul.f32 %v413, 0.4
    %v514 = vmul.f32 %v437, 0.4
    %v515 = vmul.f32 %v434, 0.4
    %v516 = vmul.f32 %v416, 0.4
    %v517 = vmul.f32 %v438, 0.4
    %v518 = vmul.f32 %v435, 0.4
    %v519 = vmul.f32 %v419, 0.4
    %v520 = vmul.f32 %v439, 0.4
    %vm533 = vcmask 1045504
    %v534 = vrot.slane %v509, 2
    %v535 = vrot.slane %v510, 2
    %v536 = vsel %vm533, %v534, %v535
    %v537 = vrot.slane %v511, 2
    %v538 = vsel %vm533, %v535, %v537
    %v539 = vrot.slane %v512, 2
    %v540 = vrot.slane %v513, 2
    %v541 = vsel %vm533, %v539, %v540
    %v542 = vrot.slane %v514, 2
    %v543 = vsel %vm533, %v540, %v542
    %v544 = vrot.slane %v515, 2
    %v545 = vrot.slane %v516, 2
    %v546 = vsel %vm533, %v544, %v545
    %v547 = vrot.slane %v517, 2
    %v548 = vsel %vm533, %v545, %v547
    %v549 = vrot.slane %v518, 2
    %v550 = vrot.slane %v519, 2
    %v551 = vsel %vm533, %v549, %v550
    %v552 = vrot.slane %v520, 2
    %v553 = vsel %vm533, %v550, %v552
    %v562 = vadd.f32 %v501, %v536
    %v563 = vadd.f32 %v502, %v538
    %v564 = vadd.f32 %v503, %v541
    %v565 = vadd.f32 %v504, %v543
    %v566 = vadd.f32 %v505, %v546
    %v567 = vadd.f32 %v506, %v548
    %v568 = vadd.f32 %v507, %v551
    %v569 = vadd.f32 %v508, %v553
    %vm570 = vcmask 1044480
    %v571 = vrot.slane %v448, 3
    %v572 = vrot.slane %v449, 3
    %v573 = vsel %vm570, %v571, %v572
    %v574 = vrot.slane %v450, 3
    %v575 = vsel %vm570, %v572, %v574
    %v576 = vrot.slane %v451, 3
    %v577 = vrot.slane %v452, 3
    %v578 = vsel %vm570, %v576, %v577
    %v579 = vrot.slane %v453, 3
    %v580 = vsel %vm570, %v577, %v579
    %v581 = vrot.slane %v454, 3
    %v582 = vrot.slane %v455, 3
    %v583 = vsel %vm570, %v581, %v582
    %v584 = vrot.slane %v456, 3
    %v585 = vsel %vm570, %v582, %v584
    %v586 = vrot.slane %v457, 3
    %v587 = vrot.slane %v458, 3
    %v588 = vsel %vm570, %v586, %v587
    %v589 = vrot.slane %v459, 3
    %v590 = vsel %vm570, %v587, %v589
    %v599 = vadd.f32 %v562, %v573
    %v600 = vadd.f32 %v563, %v575
    %v601 = vadd.f32 %v564, %v578
    %v602 = vadd.f32 %v565, %v580
    %v603 = vadd.f32 %v566, %v583
    %v604 = vadd.f32 %v567, %v585
    %v605 = vadd.f32 %v568, %v588
    %v606 = vadd.f32 %v569, %v590
    %v607 = vmul.f32 %v436, 0.05
    %v608 = vmul.f32 %v437, 0.05
    %v609 = vmul.f32 %v438, 0.05
    %v610 = vmul.f32 %v439, 0.05
    %vm623 = vcmask 1043456
    %v624 = vrot.slane %v440, 4
    %v625 = vrot.slane %v441, 4
    %v626 = vsel %vm623, %v624, %v625
    %v627 = vrot.slane %v607, 4
    %v628 = vsel %vm623, %v625, %v627
    %v629 = vrot.slane %v442, 4
    %v630 = vrot.slane %v443, 4
    %v631 = vsel %vm623, %v629, %v630
    %v632 = vrot.slane %v608, 4
    %v633 = vsel %vm623, %v630, %v632
    %v634 = vrot.slane %v444, 4
    %v635 = vrot.slane %v445, 4
    %v636 = vsel %vm623, %v634, %v635
    %v637 = vrot.slane %v609, 4
    %v638 = vsel %vm623, %v635, %v637
    %v639 = vrot.slane %v446, 4
    %v640 = vrot.slane %v447, 4
    %v641 = vsel %vm623, %v639, %v640
    %v642 = vrot.slane %v610, 4
    %v643 = vsel %vm623, %v640, %v642
    %v652 = vadd.f32 %v599, %v626
    %v653 = vadd.f32 %v600, %v628
    %v654 = vadd.f32 %v601, %v631
    %v655 = vadd.f32 %v602, %v633
    %v656 = vadd.f32 %v603, %v636
    %v657 = vadd.f32 %v604, %v638
    %v658 = vadd.f32 %v605, %v641
    %v659 = vadd.f32 %v606, %v643
    %v660 = vsel %vm75, 1, 0
    %v661 = vsel %vm76, 1, 0
    %vm662 = vcmp.eq.s32.totalorder %v660, 1
    %vm663 = vcmp.eq.s32.totalorder %v661, 1
    %v664 = vsel %vm662, %v652, 0.0
    %v665 = vsel %vm663, %v653, 0.0
    %v666 = vsel %vm662, %v654, 0.0
    %v667 = vsel %vm663, %v655, 0.0
    %v668 = vsel %vm662, %v656, 0.0
    %v669 = vsel %vm663, %v657, 0.0
    %v670 = vsel %vm662, %v658, 0.0
    %v671 = vsel %vm663, %v659, 0.0
    %673 = vset.pattern.permute.xlu0 0
    %674 = vperm.xlu0 %673, %v664
    %v675 = vpop.permute.xlu0 %674
    %678 = vset.pattern.permute.xlu0 0
    %679 = vperm.xlu0 %678, %v665
    %v680 = vpop.permute.xlu0 %679
    %683 = vset.pattern.permute.xlu0 0
    %684 = vperm.xlu0 %683, %v666
    %v685 = vpop.permute.xlu0 %684
    %688 = vset.pattern.permute.xlu0 0
    %689 = vperm.xlu0 %688, %v667
    %v690 = vpop.permute.xlu0 %689
    %693 = vset.pattern.permute.xlu0 0
    %694 = vperm.xlu0 %693, %v668
    %v695 = vpop.permute.xlu0 %694
    %698 = vset.pattern.permute.xlu0 0
    %699 = vperm.xlu0 %698, %v669
    %v700 = vpop.permute.xlu0 %699
    %703 = vset.pattern.permute.xlu0 0
    %704 = vperm.xlu0 %703, %v670
    %v705 = vpop.permute.xlu0 %704
    %708 = vset.pattern.permute.xlu0 0
    %709 = vperm.xlu0 %708, %v671
    %v710 = vpop.permute.xlu0 %709
    %712 = vset.pattern.permute.xlu0 15
    %713 = vperm.xlu0 %712, %v664
    %v714 = vpop.permute.xlu0 %713
    %716 = vset.pattern.permute.xlu0 15
    %717 = vperm.xlu0 %716, %v665
    %v718 = vpop.permute.xlu0 %717
    %720 = vset.pattern.permute.xlu0 15
    %721 = vperm.xlu0 %720, %v666
    %v722 = vpop.permute.xlu0 %721
    %724 = vset.pattern.permute.xlu0 15
    %725 = vperm.xlu0 %724, %v667
    %v726 = vpop.permute.xlu0 %725
    %728 = vset.pattern.permute.xlu0 15
    %729 = vperm.xlu0 %728, %v668
    %v730 = vpop.permute.xlu0 %729
    %732 = vset.pattern.permute.xlu0 15
    %733 = vperm.xlu0 %732, %v669
    %v734 = vpop.permute.xlu0 %733
    %736 = vset.pattern.permute.xlu0 15
    %737 = vperm.xlu0 %736, %v670
    %v738 = vpop.permute.xlu0 %737
    %740 = vset.pattern.permute.xlu0 15
    %741 = vperm.xlu0 %740, %v671
    %v742 = vpop.permute.xlu0 %741
    %744 = vrot.lane.b32.xlu0 %v664, 2
    %v745 = vpop.permute.xlu0 %744
    %746 = vrot.lane.b32.xlu0 %v665, 2
    %v747 = vpop.permute.xlu0 %746
    %748 = vrot.lane.b32.xlu0 %v666, 2
    %v749 = vpop.permute.xlu0 %748
    %750 = vrot.lane.b32.xlu0 %v667, 2
    %v751 = vpop.permute.xlu0 %750
    %752 = vrot.lane.b32.xlu0 %v668, 2
    %v753 = vpop.permute.xlu0 %752
    %754 = vrot.lane.b32.xlu0 %v669, 2
    %v755 = vpop.permute.xlu0 %754
    %756 = vrot.lane.b32.xlu0 %v670, 2
    %v757 = vpop.permute.xlu0 %756
    %758 = vrot.lane.b32.xlu0 %v671, 2
    %v759 = vpop.permute.xlu0 %758
    %v768 = vsel %vm173, %v675, %v745
    %v769 = vsel %vm173, %v680, %v747
    %v770 = vsel %vm173, %v685, %v749
    %v771 = vsel %vm173, %v690, %v751
    %v772 = vsel %vm173, %v695, %v753
    %v773 = vsel %vm173, %v700, %v755
    %v774 = vsel %vm173, %v705, %v757
    %v775 = vsel %vm173, %v710, %v759
    %v776 = vsel %vm182, %v768, %v714
    %v777 = vsel %vm182, %v769, %v718
    %v778 = vsel %vm182, %v770, %v722
    %v779 = vsel %vm182, %v771, %v726
    %v780 = vsel %vm182, %v772, %v730
    %v781 = vsel %vm182, %v773, %v734
    %v782 = vsel %vm182, %v774, %v738
    %v783 = vsel %vm182, %v775, %v742
    %v784 = vmul.f32 %v776, 0.2
    %v785 = vmul.f32 %v777, 0.2
    %v786 = vmul.f32 %v778, 0.2
    %v787 = vmul.f32 %v779, 0.2
    %v788 = vmul.f32 %v780, 0.2
    %v789 = vmul.f32 %v781, 0.2
    %v790 = vmul.f32 %v782, 0.2
    %v791 = vmul.f32 %v783, 0.2
    %800 = vrot.lane.b32.xlu0 %v776, 127
    %v801 = vpop.permute.xlu0 %800
    %802 = vrot.lane.b32.xlu0 %v777, 127
    %v803 = vpop.permute.xlu0 %802
    %804 = vrot.lane.b32.xlu0 %v778, 127
    %v805 = vpop.permute.xlu0 %804
    %806 = vrot.lane.b32.xlu0 %v779, 127
    %v807 = vpop.permute.xlu0 %806
    %808 = vrot.lane.b32.xlu0 %v780, 127
    %v809 = vpop.permute.xlu0 %808
    %810 = vrot.lane.b32.xlu0 %v781, 127
    %v811 = vpop.permute.xlu0 %810
    %812 = vrot.lane.b32.xlu0 %v782, 127
    %v813 = vpop.permute.xlu0 %812
    %814 = vrot.lane.b32.xlu0 %v783, 127
    %v815 = vpop.permute.xlu0 %814
    %v824 = vadd.f32 %v784, %v801
    %v825 = vadd.f32 %v785, %v803
    %v826 = vadd.f32 %v786, %v805
    %v827 = vadd.f32 %v787, %v807
    %v828 = vadd.f32 %v788, %v809
    %v829 = vadd.f32 %v789, %v811
    %v830 = vadd.f32 %v790, %v813
    %v831 = vadd.f32 %v791, %v815
    %v832 = vmul.f32 %v776, 1.6
    %v833 = vmul.f32 %v777, 1.6
    %v834 = vmul.f32 %v778, 1.6
    %v835 = vmul.f32 %v779, 1.6
    %v836 = vmul.f32 %v780, 1.6
    %v837 = vmul.f32 %v781, 1.6
    %v838 = vmul.f32 %v782, 1.6
    %v839 = vmul.f32 %v783, 1.6
    %848 = vrot.lane.b32.xlu0 %v832, 126
    %v849 = vpop.permute.xlu0 %848
    %850 = vrot.lane.b32.xlu0 %v833, 126
    %v851 = vpop.permute.xlu0 %850
    %852 = vrot.lane.b32.xlu0 %v834, 126
    %v853 = vpop.permute.xlu0 %852
    %854 = vrot.lane.b32.xlu0 %v835, 126
    %v855 = vpop.permute.xlu0 %854
    %856 = vrot.lane.b32.xlu0 %v836, 126
    %v857 = vpop.permute.xlu0 %856
    %858 = vrot.lane.b32.xlu0 %v837, 126
    %v859 = vpop.permute.xlu0 %858
    %860 = vrot.lane.b32.xlu0 %v838, 126
    %v861 = vpop.permute.xlu0 %860
    %862 = vrot.lane.b32.xlu0 %v839, 126
    %v863 = vpop.permute.xlu0 %862
    %v872 = vadd.f32 %v824, %v849
    %v873 = vadd.f32 %v825, %v851
    %v874 = vadd.f32 %v826, %v853
    %v875 = vadd.f32 %v827, %v855
    %v876 = vadd.f32 %v828, %v857
    %v877 = vadd.f32 %v829, %v859
    %v878 = vadd.f32 %v830, %v861
    %v879 = vadd.f32 %v831, %v863
    %880 = vrot.lane.b32.xlu0 %v776, 125
    %v881 = vpop.permute.xlu0 %880
    %882 = vrot.lane.b32.xlu0 %v777, 125
    %v883 = vpop.permute.xlu0 %882
    %884 = vrot.lane.b32.xlu0 %v778, 125
    %v885 = vpop.permute.xlu0 %884
    %886 = vrot.lane.b32.xlu0 %v779, 125
    %v887 = vpop.permute.xlu0 %886
    %888 = vrot.lane.b32.xlu0 %v780, 125
    %v889 = vpop.permute.xlu0 %888
    %890 = vrot.lane.b32.xlu0 %v781, 125
    %v891 = vpop.permute.xlu0 %890
    %892 = vrot.lane.b32.xlu0 %v782, 125
    %v893 = vpop.permute.xlu0 %892
    %894 = vrot.lane.b32.xlu0 %v783, 125
    %v895 = vpop.permute.xlu0 %894
    %v904 = vadd.f32 %v872, %v881
    %v905 = vadd.f32 %v873, %v883
    %v906 = vadd.f32 %v874, %v885
    %v907 = vadd.f32 %v875, %v887
    %v908 = vadd.f32 %v876, %v889
    %v909 = vadd.f32 %v877, %v891
    %v910 = vadd.f32 %v878, %v893
    %v911 = vadd.f32 %v879, %v895
    %920 = vrot.lane.b32.xlu0 %v784, 124
    %v921 = vpop.permute.xlu0 %920
    %922 = vrot.lane.b32.xlu0 %v785, 124
    %v923 = vpop.permute.xlu0 %922
    %924 = vrot.lane.b32.xlu0 %v786, 124
    %v925 = vpop.permute.xlu0 %924
    %926 = vrot.lane.b32.xlu0 %v787, 124
    %v927 = vpop.permute.xlu0 %926
    %928 = vrot.lane.b32.xlu0 %v788, 124
    %v929 = vpop.permute.xlu0 %928
    %930 = vrot.lane.b32.xlu0 %v789, 124
    %v931 = vpop.permute.xlu0 %930
    %932 = vrot.lane.b32.xlu0 %v790, 124
    %v933 = vpop.permute.xlu0 %932
    %934 = vrot.lane.b32.xlu0 %v791, 124
    %v935 = vpop.permute.xlu0 %934
    %v944 = vadd.f32 %v904, %v921
    %v945 = vadd.f32 %v905, %v923
    %v946 = vadd.f32 %v906, %v925
    %v947 = vadd.f32 %v907, %v927
    %v948 = vadd.f32 %v908, %v929
    %v949 = vadd.f32 %v909, %v931
    %v950 = vadd.f32 %v910, %v933
    %v951 = vadd.f32 %v911, %v935
    %v952 = vlaneseq
    %v953 = vshrl.u32 %v952, 7
    %v954 = vsub.s32 0, %v953
    %v955 = vrot.slane %v944, %v954
    %v956 = vlaneseq
    %v957 = vshrl.u32 %v956, 7
    %v958 = vsub.s32 0, %v957
    %v959 = vrot.slane %v946, %v958
    %v960 = vlaneseq
    %v961 = vshrl.u32 %v960, 7
    %v962 = vsub.s32 0, %v961
    %v963 = vrot.slane %v948, %v962
    %v964 = vlaneseq
    %v965 = vshrl.u32 %v964, 7
    %v966 = vsub.s32 0, %v965
    %v967 = vrot.slane %v950, %v966
    %v968 = vlaneseq
    %v969 = vshrl.u32 %v968, 7
    %v970 = vsub.s32 7, %v969
    %v971 = vrot.slane %v945, %v970
    %v972 = vlaneseq
    %v973 = vshrl.u32 %v972, 7
    %v974 = vsub.s32 7, %v973
    %v975 = vrot.slane %v947, %v974
    %v976 = vlaneseq
    %v977 = vshrl.u32 %v976, 7
    %v978 = vsub.s32 7, %v977
    %v979 = vrot.slane %v949, %v978
    %v980 = vlaneseq
    %v981 = vshrl.u32 %v980, 7
    %v982 = vsub.s32 7, %v981
    %v983 = vrot.slane %v951, %v982
    %v992 = vrot.slane %v944, 6
    %v993 = vrot.slane %v945, 6
    %v994 = vsel %vm407, %v992, %v993
    %v995 = vrot.slane %v946, 6
    %v996 = vrot.slane %v947, 6
    %v997 = vsel %vm407, %v995, %v996
    %v998 = vrot.slane %v948, 6
    %v999 = vrot.slane %v949, 6
    %v1000 = vsel %vm407, %v998, %v999
    %v1001 = vrot.slane %v950, 6
    %v1002 = vrot.slane %v951, 6
    %v1003 = vsel %vm407, %v1001, %v1002
    %v1016 = vsel %vm407, %v955, %v992
    %v1017 = vsel %vm407, %v959, %v995
    %v1018 = vsel %vm407, %v963, %v998
    %v1019 = vsel %vm407, %v967, %v1001
    %v1020 = vsel %vm407, %v993, %v971
    %v1021 = vsel %vm407, %v996, %v975
    %v1022 = vsel %vm407, %v999, %v979
    %v1023 = vsel %vm407, %v1002, %v983
    %v1024 = vmul.f32 %v1016, 0.05
    %v1025 = vmul.f32 %v994, 0.05
    %v1026 = vmul.f32 %v1017, 0.05
    %v1027 = vmul.f32 %v997, 0.05
    %v1028 = vmul.f32 %v1018, 0.05
    %v1029 = vmul.f32 %v1000, 0.05
    %v1030 = vmul.f32 %v1019, 0.05
    %v1031 = vmul.f32 %v1003, 0.05
    %v1032 = vmul.f32 %v1016, 0.25
    %v1033 = vmul.f32 %v994, 0.25
    %v1034 = vmul.f32 %v1020, 0.25
    %v1035 = vmul.f32 %v1017, 0.25
    %v1036 = vmul.f32 %v997, 0.25
    %v1037 = vmul.f32 %v1021, 0.25
    %v1038 = vmul.f32 %v1018, 0.25
    %v1039 = vmul.f32 %v1000, 0.25
    %v1040 = vmul.f32 %v1022, 0.25
    %v1041 = vmul.f32 %v1019, 0.25
    %v1042 = vmul.f32 %v1003, 0.25
    %v1043 = vmul.f32 %v1023, 0.25
    %v1056 = vrot.slane %v1032, 1
    %v1057 = vrot.slane %v1033, 1
    %v1058 = vsel %vm472, %v1056, %v1057
    %v1059 = vrot.slane %v1034, 1
    %v1060 = vsel %vm472, %v1057, %v1059
    %v1061 = vrot.slane %v1035, 1
    %v1062 = vrot.slane %v1036, 1
    %v1063 = vsel %vm472, %v1061, %v1062
    %v1064 = vrot.slane %v1037, 1
    %v1065 = vsel %vm472, %v1062, %v1064
    %v1066 = vrot.slane %v1038, 1
    %v1067 = vrot.slane %v1039, 1
    %v1068 = vsel %vm472, %v1066, %v1067
    %v1069 = vrot.slane %v1040, 1
    %v1070 = vsel %vm472, %v1067, %v1069
    %v1071 = vrot.slane %v1041, 1
    %v1072 = vrot.slane %v1042, 1
    %v1073 = vsel %vm472, %v1071, %v1072
    %v1074 = vrot.slane %v1043, 1
    %v1075 = vsel %vm472, %v1072, %v1074
    %v1084 = vadd.f32 %v1024, %v1058
    %v1085 = vadd.f32 %v1025, %v1060
    %v1086 = vadd.f32 %v1026, %v1063
    %v1087 = vadd.f32 %v1027, %v1065
    %v1088 = vadd.f32 %v1028, %v1068
    %v1089 = vadd.f32 %v1029, %v1070
    %v1090 = vadd.f32 %v1030, %v1073
    %v1091 = vadd.f32 %v1031, %v1075
    %v1092 = vmul.f32 %v1016, 0.4
    %v1093 = vmul.f32 %v994, 0.4
    %v1094 = vmul.f32 %v1020, 0.4
    %v1095 = vmul.f32 %v1017, 0.4
    %v1096 = vmul.f32 %v997, 0.4
    %v1097 = vmul.f32 %v1021, 0.4
    %v1098 = vmul.f32 %v1018, 0.4
    %v1099 = vmul.f32 %v1000, 0.4
    %v1100 = vmul.f32 %v1022, 0.4
    %v1101 = vmul.f32 %v1019, 0.4
    %v1102 = vmul.f32 %v1003, 0.4
    %v1103 = vmul.f32 %v1023, 0.4
    %v1116 = vrot.slane %v1092, 2
    %v1117 = vrot.slane %v1093, 2
    %v1118 = vsel %vm533, %v1116, %v1117
    %v1119 = vrot.slane %v1094, 2
    %v1120 = vsel %vm533, %v1117, %v1119
    %v1121 = vrot.slane %v1095, 2
    %v1122 = vrot.slane %v1096, 2
    %v1123 = vsel %vm533, %v1121, %v1122
    %v1124 = vrot.slane %v1097, 2
    %v1125 = vsel %vm533, %v1122, %v1124
    %v1126 = vrot.slane %v1098, 2
    %v1127 = vrot.slane %v1099, 2
    %v1128 = vsel %vm533, %v1126, %v1127
    %v1129 = vrot.slane %v1100, 2
    %v1130 = vsel %vm533, %v1127, %v1129
    %v1131 = vrot.slane %v1101, 2
    %v1132 = vrot.slane %v1102, 2
    %v1133 = vsel %vm533, %v1131, %v1132
    %v1134 = vrot.slane %v1103, 2
    %v1135 = vsel %vm533, %v1132, %v1134
    %v1144 = vadd.f32 %v1084, %v1118
    %v1145 = vadd.f32 %v1085, %v1120
    %v1146 = vadd.f32 %v1086, %v1123
    %v1147 = vadd.f32 %v1087, %v1125
    %v1148 = vadd.f32 %v1088, %v1128
    %v1149 = vadd.f32 %v1089, %v1130
    %v1150 = vadd.f32 %v1090, %v1133
    %v1151 = vadd.f32 %v1091, %v1135
    %v1152 = vrot.slane %v1032, 3
    %v1153 = vrot.slane %v1033, 3
    %v1154 = vsel %vm570, %v1152, %v1153
    %v1155 = vrot.slane %v1034, 3
    %v1156 = vsel %vm570, %v1153, %v1155
    %v1157 = vrot.slane %v1035, 3
    %v1158 = vrot.slane %v1036, 3
    %v1159 = vsel %vm570, %v1157, %v1158
    %v1160 = vrot.slane %v1037, 3
    %v1161 = vsel %vm570, %v1158, %v1160
    %v1162 = vrot.slane %v1038, 3
    %v1163 = vrot.slane %v1039, 3
    %v1164 = vsel %vm570, %v1162, %v1163
    %v1165 = vrot.slane %v1040, 3
    %v1166 = vsel %vm570, %v1163, %v1165
    %v1167 = vrot.slane %v1041, 3
    %v1168 = vrot.slane %v1042, 3
    %v1169 = vsel %vm570, %v1167, %v1168
    %v1170 = vrot.slane %v1043, 3
    %v1171 = vsel %vm570, %v1168, %v1170
    %v1180 = vadd.f32 %v1144, %v1154
    %v1181 = vadd.f32 %v1145, %v1156
    %v1182 = vadd.f32 %v1146, %v1159
    %v1183 = vadd.f32 %v1147, %v1161
    %v1184 = vadd.f32 %v1148, %v1164
    %v1185 = vadd.f32 %v1149, %v1166
    %v1186 = vadd.f32 %v1150, %v1169
    %v1187 = vadd.f32 %v1151, %v1171
    %v1188 = vmul.f32 %v1020, 0.05
    %v1189 = vmul.f32 %v1021, 0.05
    %v1190 = vmul.f32 %v1022, 0.05
    %v1191 = vmul.f32 %v1023, 0.05
    %v1204 = vrot.slane %v1024, 4
    %v1205 = vrot.slane %v1025, 4
    %v1206 = vsel %vm623, %v1204, %v1205
    %v1207 = vrot.slane %v1188, 4
    %v1208 = vsel %vm623, %v1205, %v1207
    %v1209 = vrot.slane %v1026, 4
    %v1210 = vrot.slane %v1027, 4
    %v1211 = vsel %vm623, %v1209, %v1210
    %v1212 = vrot.slane %v1189, 4
    %v1213 = vsel %vm623, %v1210, %v1212
    %v1214 = vrot.slane %v1028, 4
    %v1215 = vrot.slane %v1029, 4
    %v1216 = vsel %vm623, %v1214, %v1215
    %v1217 = vrot.slane %v1190, 4
    %v1218 = vsel %vm623, %v1215, %v1217
    %v1219 = vrot.slane %v1030, 4
    %v1220 = vrot.slane %v1031, 4
    %v1221 = vsel %vm623, %v1219, %v1220
    %v1222 = vrot.slane %v1191, 4
    %v1223 = vsel %vm623, %v1220, %v1222
    %v1232 = vadd.f32 %v1180, %v1206
    %v1233 = vadd.f32 %v1181, %v1208
    %v1234 = vadd.f32 %v1182, %v1211
    %v1235 = vadd.f32 %v1183, %v1213
    %v1236 = vadd.f32 %v1184, %v1216
    %v1237 = vadd.f32 %v1185, %v1218
    %v1238 = vadd.f32 %v1186, %v1221
    %v1239 = vadd.f32 %v1187, %v1223
    %v1240 = vsub.f32 %v56, %v1232
    %v1241 = vsub.f32 %v57, %v1233
    %v1242 = vsub.f32 %v58, %v1234
    %v1243 = vsub.f32 %v59, %v1235
    %v1244 = vsub.f32 %v60, %v1236
    %v1245 = vsub.f32 %v61, %v1237
    %v1246 = vsub.f32 %v62, %v1238
    %v1247 = vsub.f32 %v63, %v1239
    %v1248 = vand.u32 2147483647, %v1240
    %v1249 = vand.u32 2147483647, %v1241
    %v1250 = vand.u32 2147483647, %v1242
    %v1251 = vand.u32 2147483647, %v1243
    %v1252 = vand.u32 2147483647, %v1244
    %v1253 = vand.u32 2147483647, %v1245
    %v1254 = vand.u32 2147483647, %v1246
    %v1255 = vand.u32 2147483647, %v1247
    %vm1256 = vcmask 130048
    %v1257 = vsel %vm1256, %v1248, 0.0
    %v1258 = vsel %vm1256, %v1249, 0.0
    %v1259 = vadd.f32 %v1257, %v1258
    %v1260 = vsel %vm1256, %v1250, 0.0
    %v1261 = vadd.f32 %v1259, %v1260
    %v1262 = vsel %vm1256, %v1251, 0.0
    %v1263 = vadd.f32 %v1261, %v1262
    %v1264 = vsel %vm1256, %v1252, 0.0
    %v1265 = vadd.f32 %v1263, %v1264
    %v1266 = vsel %vm1256, %v1253, 0.0
    %v1267 = vadd.f32 %v1265, %v1266
    %v1268 = vsel %vm1256, %v1254, 0.0
    %v1269 = vadd.f32 %v1267, %v1268
    %v1270 = vsel %vm1256, %v1255, 0.0
    %v1271 = vadd.f32 %v1269, %v1270
    %1272 = vadd.xlane.f32.xlu0 %v1271
    %v1273 = vpop.xlane.xlu0 %1272
    %v1274 = vrot.slane %v1273, 4
    %v1275 = vadd.f32 %v1273, %v1274
    %v1276 = vrot.slane %v1275, 2
    %v1277 = vadd.f32 %v1275, %v1276
    %v1278 = vrot.slane %v1277, 1
    %v1279 = vadd.f32 %v1277, %v1278
    %s1280 = vtos %v1279
    %vm1281 = vcmp.eq.s32.totalorder %v65, 0
    %vm1282 = vcmp.eq.s32.totalorder %v68, 0
    %vm1283 = vmand %vm1281, %vm1282
    %v1284 = vstv %s1280
    %v1285 = vsel %vm1283, %v1284, 0.0
    %1286 = vst [vmem:[#allocation7] sm:$0xff] %v1285
    // Predicated region
    $region18: #{tpu_custom_call.1} parent=1 // pred_check
      _
    $region19: #{tpu_custom_call.1} parent=1 // pred_check_branch
      %1288 = sbr.rel (0) target = $region21
    $region20: #{tpu_custom_call.1} parent=1 // pred_region
      %s1290 = ssub.s32 128, 128
      %1291 = vsyncadd [#allocation4], %s1290
      %s1293 = sshll.u32 [#allocation7], 4
      %s1294 = int_to_ptr.vmem [resolvable:$true] %s1293
      %1296 = dma.vmem_to_hbm [thread:$0]  %s1294, 128, %s2, [#allocation4]
    $region21: #{tpu_custom_call.1} parent=1 // pred_fallthru
      _
    // Predicated region
    $region22: #{tpu_custom_call.1} parent=1 // pred_check
      _
    $region23: #{tpu_custom_call.1} parent=1 // pred_check_branch
      %1298 = sbr.rel (0) target = $region25
    $region24: #{tpu_custom_call.1} parent=1 // pred_region
      %1299 = dma.done [#allocation4], 128
    $region25: #{tpu_custom_call.1} parent=1 // pred_fallthru
      _
    %1300 = vsyncpa [#allocation3], 1
    %1301 = vsyncpa [#allocation6], 1
    %1302 = vsyncpa [#allocation4], 1

</llo_original>
